<compile_context>
chip_gen: v5e
topology: v5e:2x2
jax: 0.10.0
libtpu: 0.0.40
codegen_flags: <defaults>
</compile_context>

<pallas_src>
import jax
import jax.numpy as jnp
from jax.experimental import pallas as pl
from jax.experimental.pallas import tpu as pltpu


def _round_up(n: int, m: int) -> int:
    return ((n + m - 1) // m) * m


def mlp_kernel(x_ref, w1_ref, b1_ref, w2_ref, b2_ref, o_ref):
    # Cast activations to bf16 in-kernel (avoids a wrapper-side HBM round trip).
    x = x_ref[...].astype(w1_ref.dtype)
    # layer1: bf16 MXU matmul, f32 accumulation; bias + ReLU epilogue in f32.
    h = jnp.dot(x, w1_ref[...], preferred_element_type=jnp.float32)
    h = jnp.maximum(h + b1_ref[...], 0.0)
    # layer2: cast activation back to bf16 for the MXU, accumulate in f32.
    y = jnp.dot(h.astype(w2_ref.dtype), w2_ref[...],
                preferred_element_type=jnp.float32)
    o_ref[...] = (y + b2_ref[...]).astype(o_ref.dtype)


def prepare_mlp_params(w1_t, b1, w2_t, b2, *, compute_dtype=jnp.bfloat16):
    """One-time parameter conversion (hoisted out of the per-call path).

    w1_t: [D_in, H]   (PyTorch layer1.weight, transposed)
    b1:   [H]
    w2_t: [H, D_out]  (PyTorch layer2.weight, transposed)
    b2:   [D_out]
    """
    w1_c = jnp.asarray(w1_t).astype(compute_dtype)
    w2_c = jnp.asarray(w2_t).astype(compute_dtype)
    b1_c = jnp.asarray(b1, jnp.float32).reshape(1, -1)
    b2_c = jnp.asarray(b2, jnp.float32).reshape(1, -1)
    return w1_c, b1_c, w2_c, b2_c


def _choose_batch_tile(B: int, block_batch: int) -> int:
    if B <= 16:
        return B  # single step; full-dim block satisfies the tiling rule
    # Aim for >= 2 grid steps on large batches (v7x megacore), keep the tile a
    # multiple of 16 (bf16/f32 sublane packing), cap at block_batch.
    tb = min(block_batch, _round_up((B + 1) // 2, 16))
    return max(16, (tb // 16) * 16)


def _pallas_mlp(x_p, w1, b1, w2, b2, *, tb, single_buffer):
    Bp, D_in = x_p.shape
    H = w1.shape[1]
    D_out = w2.shape[1]
    steps = Bp // tb

    if single_buffer:
        # Constant index_map -> block never changes; one VMEM buffer suffices.
        def const_spec(shape):
            return pl.BlockSpec(shape, lambda i: (0, 0),
                                pipeline_mode=pl.Buffered(1))
    else:
        def const_spec(shape):
            return pl.BlockSpec(shape, lambda i: (0, 0))

    w_bytes = ((w1.size + w2.size) * w1.dtype.itemsize
               + (b1.size + b2.size) * 4)
    io_bytes = 2 * tb * (D_in * x_p.dtype.itemsize + D_out * 4)  # dbl-buffered
    act_bytes = 2 * tb * max(H, D_out) * 4                       # intermediates
    w_bufs = 1 if single_buffer else 2
    vmem_limit = int(min(64 * 1024 * 1024,
                         max(32 * 1024 * 1024,
                             2 * (w_bufs * w_bytes + io_bytes + act_bytes))))

    cost = pl.CostEstimate(
        flops=2 * Bp * (D_in * H + H * D_out),
        bytes_accessed=int(Bp * D_in * x_p.dtype.itemsize + w_bytes
                           + Bp * D_out * 4),
        transcendentals=0,
    )

    return pl.pallas_call(
        mlp_kernel,
        out_shape=jax.ShapeDtypeStruct((Bp, D_out), jnp.float32),
        grid=(steps,),
        in_specs=[
            pl.BlockSpec((tb, D_in), lambda i: (i, 0)),  # x: tiled over batch
            const_spec((D_in, H)),                       # w1: VMEM-resident
            const_spec((1, H)),                          # b1
            const_spec((H, D_out)),                      # w2: VMEM-resident
            const_spec((1, D_out)),                      # b2
        ],
        out_specs=pl.BlockSpec((tb, D_out), lambda i: (i, 0)),
        compiler_params=pltpu.CompilerParams(
            dimension_semantics=("parallel",),   # megacore sharding on v7x
            vmem_limit_bytes=vmem_limit,
        ),
        cost_estimate=cost,
    )(x_p, w1, b1, w2, b2)


_SINGLE_BUFFER_OK = True  # flipped to False once if pl.Buffered(1) is rejected


def mlp_forward(x, params, *, block_batch=512):
    """Fused MLP forward: relu(x @ w1 + b1) @ w2 + b2.

    x: [B, D_in] (f32); params: output of prepare_mlp_params().
    """
    global _SINGLE_BUFFER_OK
    w1, b1, w2, b2 = params
    B, D_in = x.shape
    assert w1.shape[0] == D_in

    tb = _choose_batch_tile(B, block_batch)
    Bp = _round_up(B, tb)
    x_p = x if Bp == B else jnp.pad(x, ((0, Bp - B), (0, 0)))

    out_p = None
    if _SINGLE_BUFFER_OK:
        try:
            out_p = _pallas_mlp(x_p, w1, b1, w2, b2, tb=tb, single_buffer=True)
            out_p.block_until_ready()  # surface any lowering error here
        except Exception:
            _SINGLE_BUFFER_OK = False
            out_p = None
    if out_p is None:
        out_p = _pallas_mlp(x_p, w1, b1, w2, b2, tb=tb, single_buffer=False)

    out = out_p if Bp == B else out_p[:B]
    return out.astype(x.dtype)


if __name__ == "__main__":
    # Small shapes consistent with the 2-layer MLP spec.
    batch, input_size, hidden_size, output_size = 8, 16, 32, 8

    key = jax.random.PRNGKey(0)
    kx, kw1, kb1, kw2, kb2, kx2 = jax.random.split(key, 6)

    x = jax.random.normal(kx, (batch, input_size), dtype=jnp.float32)

    # nn.Linear-style init; PyTorch weight is [out, in], stored transposed here.
    lim1 = 1.0 / jnp.sqrt(jnp.float32(input_size))
    lim2 = 1.0 / jnp.sqrt(jnp.float32(hidden_size))
    w1_t = jax.random.uniform(kw1, (input_size, hidden_size), jnp.float32, -lim1, lim1)
    b1 = jax.random.uniform(kb1, (hidden_size,), jnp.float32, -lim1, lim1)
    w2_t = jax.random.uniform(kw2, (hidden_size, output_size), jnp.float32, -lim2, lim2)
    b2 = jax.random.uniform(kb2, (output_size,), jnp.float32, -lim2, lim2)

    # One-time weight conversion (hoisted out of the per-call path).
    params = prepare_mlp_params(w1_t, b1, w2_t, b2)

    def ref(xv):
        return jnp.maximum(xv @ w1_t + b1, 0.0) @ w2_t + b2

    # Case 1: toy batch — single grid step, full-dim blocks, zero HBM padding.
    out = jax.block_until_ready(mlp_forward(x, params))
    assert out.shape == (batch, output_size)
    assert jnp.allclose(out, ref(x), atol=2e-2, rtol=2e-2), (
        f"max abs err {jnp.max(jnp.abs(out - ref(x)))}")

    # Case 2: larger batch — exercises batch tiling, padding and a >=2-step
    # "parallel" grid (megacore sharding path on v7x).
    x_big = jax.random.normal(kx2, (300, input_size), dtype=jnp.float32)
    out_big = jax.block_until_ready(mlp_forward(x_big, params))
    assert out_big.shape == (300, output_size)
    assert jnp.allclose(out_big, ref(x_big), atol=2e-2, rtol=2e-2), (
        f"max abs err {jnp.max(jnp.abs(out_big - ref(x_big)))}")

    print("KERNEL_OK")
</pallas_src>

<mosaic_0001>
module attributes {stable_mosaic.version = 11 : i64} {
  func.func @mlp_kernel(%arg0: i32, %arg1: memref<8x16xf32, #tpu.memory_space<vmem>>, %arg2: memref<16x32xbf16, #tpu.memory_space<vmem>>, %arg3: memref<1x32xf32, #tpu.memory_space<vmem>>, %arg4: memref<32x8xbf16, #tpu.memory_space<vmem>>, %arg5: memref<1x8xf32, #tpu.memory_space<vmem>>, %arg6: memref<8x8xf32, #tpu.memory_space<vmem>>) attributes {dimension_semantics = [#tpu.dimension_semantics<parallel>], iteration_bounds = array<i64: 1>, scalar_prefetch = 0 : i64, scratch_operands = 0 : i64, tpu.core_type = #tpu.core_type<tc>, window_params = [{transform_indices = @transform_0, window_bounds = array<i64: 8, 16>}, {pipeline_mode = #tpu.pipeline_mode<synchronous>, transform_indices = @transform_1, window_bounds = array<i64: 16, 32>}, {pipeline_mode = #tpu.pipeline_mode<synchronous>, transform_indices = @transform_2, window_bounds = array<i64: 1, 32>}, {pipeline_mode = #tpu.pipeline_mode<synchronous>, transform_indices = @transform_3, window_bounds = array<i64: 32, 8>}, {pipeline_mode = #tpu.pipeline_mode<synchronous>, transform_indices = @transform_4, window_bounds = array<i64: 1, 8>}, {transform_indices = @transform_5, window_bounds = array<i64: 8, 8>}]} {
    %c0 = arith.constant 0 : index
    %c0_0 = arith.constant 0 : index
    %0 = vector.load %arg1[%c0, %c0_0] : memref<8x16xf32, #tpu.memory_space<vmem>>, vector<8x16xf32>
    %1 = arith.truncf %0 : vector<8x16xf32> to vector<8x16xbf16>
    %c0_1 = arith.constant 0 : index
    %c0_2 = arith.constant 0 : index
    %2 = vector.load %arg2[%c0_1, %c0_2] : memref<16x32xbf16, #tpu.memory_space<vmem>>, vector<16x32xbf16>
    %cst = arith.constant dense<0.000000e+00> : vector<8x32xf32>
    %3 = tpu.matmul %1, %2, %cst {dimension_numbers = #tpu.dot_dimension_numbers<[1], [0], [0], [1], [0, 0, 1, 1], [], []>} : vector<8x16xbf16>, vector<16x32xbf16>, vector<8x32xf32> -> vector<8x32xf32>
    %c0_3 = arith.constant 0 : index
    %c0_4 = arith.constant 0 : index
    %4 = vector.load %arg3[%c0_3, %c0_4] : memref<1x32xf32, #tpu.memory_space<vmem>>, vector<1x32xf32>
    %5 = vector.broadcast %4 : vector<1x32xf32> to vector<8x32xf32>
    %6 = arith.addf %3, %5 : vector<8x32xf32>
    %cst_5 = arith.constant 0.000000e+00 : f32
    %7 = vector.broadcast %cst_5 : f32 to vector<8x32xf32>
    %8 = arith.maximumf %6, %7 : vector<8x32xf32>
    %9 = arith.truncf %8 : vector<8x32xf32> to vector<8x32xbf16>
    %c0_6 = arith.constant 0 : index
    %c0_7 = arith.constant 0 : index
    %10 = vector.load %arg4[%c0_6, %c0_7] : memref<32x8xbf16, #tpu.memory_space<vmem>>, vector<32x8xbf16>
    %cst_8 = arith.constant dense<0.000000e+00> : vector<8x8xf32>
    %11 = tpu.matmul %9, %10, %cst_8 {dimension_numbers = #tpu.dot_dimension_numbers<[1], [0], [0], [1], [0, 0, 1, 1], [], []>} : vector<8x32xbf16>, vector<32x8xbf16>, vector<8x8xf32> -> vector<8x8xf32>
    %c0_9 = arith.constant 0 : index
    %c0_10 = arith.constant 0 : index
    %12 = vector.load %arg5[%c0_9, %c0_10] : memref<1x8xf32, #tpu.memory_space<vmem>>, vector<1x8xf32>
    %13 = vector.broadcast %12 : vector<1x8xf32> to vector<8x8xf32>
    %14 = arith.addf %11, %13 : vector<8x8xf32>
    %c0_11 = arith.constant 0 : index
    %c0_12 = arith.constant 0 : index
    %15 = vector.load %arg6[%c0_11, %c0_12] : memref<8x8xf32, #tpu.memory_space<vmem>>, vector<8x8xf32>
    tpu.vector_store %arg6[%c0_11, %c0_12], %14 {strides = array<i32>} : memref<8x8xf32, #tpu.memory_space<vmem>>, vector<8x8xf32>,
    return
  }
  func.func @transform_0(%arg0: i32) -> (i32, i32) {
    %c0_i32 = arith.constant 0 : i32
    %c0_i32_0 = arith.constant 0 : i32
    return %arg0, %c0_i32 : i32, i32
  }
  func.func @transform_1(%arg0: i32) -> (i32, i32) {
    %c0_i32 = arith.constant 0 : i32
    %c0_i32_0 = arith.constant 0 : i32
    %c0_i32_1 = arith.constant 0 : i32
    return %c0_i32, %c0_i32_0 : i32, i32
  }
  func.func @transform_2(%arg0: i32) -> (i32, i32) {
    %c0_i32 = arith.constant 0 : i32
    %c0_i32_0 = arith.constant 0 : i32
    %c0_i32_1 = arith.constant 0 : i32
    return %c0_i32, %c0_i32_0 : i32, i32
  }
  func.func @transform_3(%arg0: i32) -> (i32, i32) {
    %c0_i32 = arith.constant 0 : i32
    %c0_i32_0 = arith.constant 0 : i32
    %c0_i32_1 = arith.constant 0 : i32
    return %c0_i32, %c0_i32_0 : i32, i32
  }
  func.func @transform_4(%arg0: i32) -> (i32, i32) {
    %c0_i32 = arith.constant 0 : i32
    %c0_i32_0 = arith.constant 0 : i32
    %c0_i32_1 = arith.constant 0 : i32
    return %c0_i32, %c0_i32_0 : i32, i32
  }
  func.func @transform_5(%arg0: i32) -> (i32, i32) {
    %c0_i32 = arith.constant 0 : i32
    %c0_i32_0 = arith.constant 0 : i32
    return %arg0, %c0_i32 : i32, i32
  }
}

module attributes {stable_mosaic.version = 11 : i64} {
  func.func @mlp_kernel(%arg0: i32, %arg1: memref<8x16xf32, #tpu.memory_space<vmem>>, %arg2: memref<16x32xbf16, #tpu.memory_space<vmem>>, %arg3: memref<1x32xf32, #tpu.memory_space<vmem>>, %arg4: memref<32x8xbf16, #tpu.memory_space<vmem>>, %arg5: memref<1x8xf32, #tpu.memory_space<vmem>>, %arg6: memref<8x8xf32, #tpu.memory_space<vmem>>) attributes {dimension_semantics = [#tpu.dimension_semantics<parallel>], iteration_bounds = array<i64: 1>, scalar_prefetch = 0 : i64, scratch_operands = 0 : i64, tpu.core_type = #tpu.core_type<tc>, window_params = [{transform_indices = @transform_0, window_bounds = array<i64: 8, 16>}, {pipeline_mode = #tpu.pipeline_mode<synchronous>, transform_indices = @transform_1, window_bounds = array<i64: 16, 32>}, {pipeline_mode = #tpu.pipeline_mode<synchronous>, transform_indices = @transform_2, window_bounds = array<i64: 1, 32>}, {pipeline_mode = #tpu.pipeline_mode<synchronous>, transform_indices = @transform_3, window_bounds = array<i64: 32, 8>}, {pipeline_mode = #tpu.pipeline_mode<synchronous>, transform_indices = @transform_4, window_bounds = array<i64: 1, 8>}, {transform_indices = @transform_5, window_bounds = array<i64: 8, 8>}]} {
    %c0 = arith.constant 0 : index
    %c0_0 = arith.constant 0 : index
    %0 = vector.load %arg1[%c0, %c0_0] : memref<8x16xf32, #tpu.memory_space<vmem>>, vector<8x16xf32>
    %1 = arith.truncf %0 : vector<8x16xf32> to vector<8x16xbf16>
    %c0_1 = arith.constant 0 : index
    %c0_2 = arith.constant 0 : index
    %2 = vector.load %arg2[%c0_1, %c0_2] : memref<16x32xbf16, #tpu.memory_space<vmem>>, vector<16x32xbf16>
    %cst = arith.constant dense<0.000000e+00> : vector<8x32xf32>
    %3 = tpu.matmul %1, %2, %cst {dimension_numbers = #tpu.dot_dimension_numbers<[1], [0], [0], [1], [0, 0, 1, 1], [], []>} : vector<8x16xbf16>, vector<16x32xbf16>, vector<8x32xf32> -> vector<8x32xf32>
    %c0_3 = arith.constant 0 : index
    %c0_4 = arith.constant 0 : index
    %4 = vector.load %arg3[%c0_3, %c0_4] : memref<1x32xf32, #tpu.memory_space<vmem>>, vector<1x32xf32>
    %5 = vector.broadcast %4 : vector<1x32xf32> to vector<8x32xf32>
    %6 = arith.addf %3, %5 : vector<8x32xf32>
    %cst_5 = arith.constant 0.000000e+00 : f32
    %7 = vector.broadcast %cst_5 : f32 to vector<8x32xf32>
    %8 = arith.maximumf %6, %7 : vector<8x32xf32>
    %9 = arith.truncf %8 : vector<8x32xf32> to vector<8x32xbf16>
    %c0_6 = arith.constant 0 : index
    %c0_7 = arith.constant 0 : index
    %10 = vector.load %arg4[%c0_6, %c0_7] : memref<32x8xbf16, #tpu.memory_space<vmem>>, vector<32x8xbf16>
    %cst_8 = arith.constant dense<0.000000e+00> : vector<8x8xf32>
    %11 = tpu.matmul %9, %10, %cst_8 {dimension_numbers = #tpu.dot_dimension_numbers<[1], [0], [0], [1], [0, 0, 1, 1], [], []>} : vector<8x32xbf16>, vector<32x8xbf16>, vector<8x8xf32> -> vector<8x8xf32>
    %c0_9 = arith.constant 0 : index
    %c0_10 = arith.constant 0 : index
    %12 = vector.load %arg5[%c0_9, %c0_10] : memref<1x8xf32, #tpu.memory_space<vmem>>, vector<1x8xf32>
    %13 = vector.broadcast %12 : vector<1x8xf32> to vector<8x8xf32>
    %14 = arith.addf %11, %13 : vector<8x8xf32>
    %c0_11 = arith.constant 0 : index
    %c0_12 = arith.constant 0 : index
    %15 = vector.load %arg6[%c0_11, %c0_12] : memref<8x8xf32, #tpu.memory_space<vmem>>, vector<8x8xf32>
    tpu.vector_store %arg6[%c0_11, %c0_12], %14 {strides = array<i32>} : memref<8x8xf32, #tpu.memory_space<vmem>>, vector<8x8xf32>,
    return
  }
  func.func @transform_0(%arg0: i32) -> (i32, i32) {
    %c0_i32 = arith.constant 0 : i32
    %c0_i32_0 = arith.constant 0 : i32
    return %arg0, %c0_i32 : i32, i32
  }
  func.func @transform_1(%arg0: i32) -> (i32, i32) {
    %c0_i32 = arith.constant 0 : i32
    %c0_i32_0 = arith.constant 0 : i32
    %c0_i32_1 = arith.constant 0 : i32
    return %c0_i32, %c0_i32_0 : i32, i32
  }
  func.func @transform_2(%arg0: i32) -> (i32, i32) {
    %c0_i32 = arith.constant 0 : i32
    %c0_i32_0 = arith.constant 0 : i32
    %c0_i32_1 = arith.constant 0 : i32
    return %c0_i32, %c0_i32_0 : i32, i32
  }
  func.func @transform_3(%arg0: i32) -> (i32, i32) {
    %c0_i32 = arith.constant 0 : i32
    %c0_i32_0 = arith.constant 0 : i32
    %c0_i32_1 = arith.constant 0 : i32
    return %c0_i32, %c0_i32_0 : i32, i32
  }
  func.func @transform_4(%arg0: i32) -> (i32, i32) {
    %c0_i32 = arith.constant 0 : i32
    %c0_i32_0 = arith.constant 0 : i32
    %c0_i32_1 = arith.constant 0 : i32
    return %c0_i32, %c0_i32_0 : i32, i32
  }
  func.func @transform_5(%arg0: i32) -> (i32, i32) {
    %c0_i32 = arith.constant 0 : i32
    %c0_i32_0 = arith.constant 0 : i32
    return %arg0, %c0_i32 : i32, i32
  }
}

</mosaic_0001>

<llo_original>
// kernel: tpu_custom_call.1
$region0: #{tpu_custom_call.1}
  #allocation0 [shape = 'u32[]', space=smem, size = 0x4, offset = 0x4, fixed_abs, tag = 'smem constant byte address 0x4 - core index']
  #allocation1 [shape = 'u32[72,128]{1,0:T(1,128)}', space=vmem, size = 0x9000, scoped, tag = 'internal scratch']
  %s0 = inlined_call_operand.vmem [shape: f32[8,16], index: 0, kind: input, shape index: {}]
  %s1 = inlined_call_operand.vmem [shape: bf16[16,32], index: 1, kind: input, shape index: {}]
  %s2 = inlined_call_operand.vmem [shape: f32[1,32], index: 2, kind: input, shape index: {}]
  %s3 = inlined_call_operand.vmem [shape: bf16[32,8], index: 3, kind: input, shape index: {}]
  %s4 = inlined_call_operand.vmem [shape: f32[1,8], index: 4, kind: input, shape index: {}]
  %s5 = inlined_call_operand.hbm [shape: f32[8,8], index: 5, kind: output, shape index: {}]
  %s6 = sld [smem:[#allocation0]]
  $region30: #{tpu_custom_call.1} parent=0
    _
  %s8 = ssub.s32 1, %s6
  %s9 = scalar_select 0, %s8, %s6
  $region1: #{tpu_custom_call.1} parent=0
    #allocation2 [shape = 'u8[4096]{0}', space=vmem, size = 0x1000, scoped, tag = 'output window, operand 0, single buffered']
    #allocation3 [shape = 's32[1]{0}', space=sflag, size = 0x4, scoped, tag = 'scoped memory for tpu_custom_call.1']
    %10 = vsyncpa [#allocation3], 0
    // Predicated region
    $region2: #{tpu_custom_call.1} parent=1 // pred_check
      _
    $region3: #{tpu_custom_call.1} parent=1 // pred_check_branch
      %12 = sbr.rel (0) target = $region5
    $region4: #{tpu_custom_call.1} parent=1 // pred_region
      _
    $region5: #{tpu_custom_call.1} parent=1 // pred_fallthru
      _
    // Predicated region
    $region6: #{tpu_custom_call.1} parent=1 // pred_check
      _
    $region7: #{tpu_custom_call.1} parent=1 // pred_check_branch
      %14 = sbr.rel (0) target = $region9
    $region8: #{tpu_custom_call.1} parent=1 // pred_region
      _
    $region9: #{tpu_custom_call.1} parent=1 // pred_fallthru
      _
    // Predicated region
    $region10: #{tpu_custom_call.1} parent=1 // pred_check
      _
    $region11: #{tpu_custom_call.1} parent=1 // pred_check_branch
      %16 = sbr.rel (0) target = $region13
    $region12: #{tpu_custom_call.1} parent=1 // pred_region
      _
    $region13: #{tpu_custom_call.1} parent=1 // pred_fallthru
      _
    // Predicated region
    $region14: #{tpu_custom_call.1} parent=1 // pred_check
      _
    $region15: #{tpu_custom_call.1} parent=1 // pred_check_branch
      %18 = sbr.rel (0) target = $region17
    $region16: #{tpu_custom_call.1} parent=1 // pred_region
      _
    $region17: #{tpu_custom_call.1} parent=1 // pred_fallthru
      _
    // Predicated region
    $region18: #{tpu_custom_call.1} parent=1 // pred_check
      _
    $region19: #{tpu_custom_call.1} parent=1 // pred_check_branch
      %20 = sbr.rel (0) target = $region21
    $region20: #{tpu_custom_call.1} parent=1 // pred_region
      _
    $region21: #{tpu_custom_call.1} parent=1 // pred_fallthru
      _
    %v22 = vld [vmem:[%s0] sm:$0xff]
    %v23 = vpack.c.bf16 %v22, %v22
    %v24 = vld [vmem:[%s1] sm:$0xf]
    %v25 = vld [vmem:[%s1 + $0x4] sm:$0xf]
    %v26 = vld [vmem:[%s2] sm:$0x1]
    %v28 = vperm.slane %v26, 0
    %v32 = vunpack.c.l.b16 %v24
    %v33 = vunpack.c.l.b16 %v25
    %v34 = vpack.c.b16 %v33, %v32
    %vm36 = vcmask 130048
    %v38 = vsel %vm36, %v23, 0
    %40 = vmatpush.bf16.msra.mxu0 0
    %41 = vmatpush.bf16.msra.mxu0 0
    %42 = vmatpush.bf16.msra.mxu0 0
    %43 = vmatpush.bf16.msra.mxu0 0
    %44 = vmatpush.bf16.msra.mxu0 0
    %45 = vmatpush.bf16.msra.mxu0 0
    %46 = vmatpush.bf16.msra.mxu0 0
    %47 = vmatpush.bf16.msra.mxu0 %v34
    %48 = vmatmul.bf16.gmra.mxu0 %v38
    %v49 = vpop.f32.mrf.mxu0
    %v50 = vadd.f32 %v28, %v49
    %v51 = vpop.f32.mrf.mxu0
    %52 = vdwg.mxu0
    %v53 = vmax.f32 %v50, 0.0
    %v54 = vpack.c.bf16 %v53, %v53
    %v55 = vld [vmem:[%s3] sm:$0xf]
    %v56 = vld [vmem:[%s3 + $0x4] sm:$0xf]
    %v57 = vld [vmem:[%s3 + $0x8] sm:$0xf]
    %v58 = vld [vmem:[%s3 + $0xc] sm:$0xf]
    %v59 = vld [vmem:[%s4] sm:$0x1]
    %v61 = vperm.slane %v59, 0
    %v67 = vunpack.c.l.b16 %v55
    %v68 = vunpack.c.l.b16 %v56
    %v69 = vunpack.c.l.b16 %v57
    %v70 = vunpack.c.l.b16 %v58
    %v71 = vpack.c.b16 %v68, %v67
    %v72 = vpack.c.b16 %v70, %v69
    %vm75 = vcmask 261120
    %v77 = vsel %vm75, %v54, 0
    %79 = vmatpush.bf16.msra.mxu0 0
    %80 = vmatpush.bf16.msra.mxu0 0
    %81 = vmatpush.bf16.msra.mxu0 0
    %82 = vmatpush.bf16.msra.mxu0 0
    %83 = vmatpush.bf16.msra.mxu0 0
    %84 = vmatpush.bf16.msra.mxu0 0
    %85 = vmatpush.bf16.msra.mxu0 %v72
    %86 = vmatpush.bf16.msra.mxu0 %v71
    %87 = vmatmul.bf16.gmra.mxu0 %v77
    %v88 = vpop.f32.mrf.mxu0
    %v89 = vadd.f32 %v61, %v88
    %v90 = vpop.f32.mrf.mxu0
    %91 = vdwg.mxu0
    %vm92 = vcmask 64512
    %93 = vst.msk [vmem:[#allocation2] sm:$0xff] %vm92, %v89
    // Predicated region
    $region22: #{tpu_custom_call.1} parent=1 // pred_check
      _
    $region23: #{tpu_custom_call.1} parent=1 // pred_check_branch
      %95 = sbr.rel (0) target = $region25
    $region24: #{tpu_custom_call.1} parent=1 // pred_region
      %97 = vsyncadd [#allocation3], 0
      %s99 = sshll.u32 [#allocation2], 4
      %s100 = int_to_ptr.vmem [resolvable:$true] %s99
      %s101 = sshll.u32 %s5, 4
      %s102 = int_to_ptr.hbm [resolvable:$true] %s101
      %104 = dma.vmem_to_hbm [thread:$0]  %s100, 128, %s102, [#allocation3]
    $region25: #{tpu_custom_call.1} parent=1 // pred_fallthru
      _
    // Predicated region
    $region26: #{tpu_custom_call.1} parent=1 // pred_check
      _
    $region27: #{tpu_custom_call.1} parent=1 // pred_check_branch
      %106 = sbr.rel (0) target = $region29
    $region28: #{tpu_custom_call.1} parent=1 // pred_region
      %108 = dma.done [#allocation3], 128
    $region29: #{tpu_custom_call.1} parent=1 // pred_fallthru
      _
    %109 = vsyncpa [#allocation3], 1

// kernel: tpu_custom_call.1
$region0: #{tpu_custom_call.1}
  #allocation0 [shape = 'u32[]', space=smem, size = 0x4, offset = 0x4, fixed_abs, tag = 'smem constant byte address 0x4 - core index']
  #allocation1 [shape = 'u32[72,128]{1,0:T(1,128)}', space=vmem, size = 0x9000, scoped, tag = 'internal scratch']
  %s0 = inlined_call_operand.vmem [shape: f32[8,16], index: 0, kind: input, shape index: {}]
  %s1 = inlined_call_operand.vmem [shape: bf16[16,32], index: 1, kind: input, shape index: {}]
  %s2 = inlined_call_operand.vmem [shape: f32[1,32], index: 2, kind: input, shape index: {}]
  %s3 = inlined_call_operand.vmem [shape: bf16[32,8], index: 3, kind: input, shape index: {}]
  %s4 = inlined_call_operand.vmem [shape: f32[1,8], index: 4, kind: input, shape index: {}]
  %s5 = inlined_call_operand.hbm [shape: f32[8,8], index: 5, kind: output, shape index: {}]
  %s6 = sld [smem:[#allocation0]]
  $region30: #{tpu_custom_call.1} parent=0
    _
  %s8 = ssub.s32 1, %s6
  %s9 = scalar_select 0, %s8, %s6
  $region1: #{tpu_custom_call.1} parent=0
    #allocation2 [shape = 'u8[4096]{0}', space=vmem, size = 0x1000, scoped, tag = 'output window, operand 0, single buffered']
    #allocation3 [shape = 's32[1]{0}', space=sflag, size = 0x4, scoped, tag = 'scoped memory for tpu_custom_call.1']
    %10 = vsyncpa [#allocation3], 0
    // Predicated region
    $region2: #{tpu_custom_call.1} parent=1 // pred_check
      _
    $region3: #{tpu_custom_call.1} parent=1 // pred_check_branch
      %12 = sbr.rel (0) target = $region5
    $region4: #{tpu_custom_call.1} parent=1 // pred_region
      _
    $region5: #{tpu_custom_call.1} parent=1 // pred_fallthru
      _
    // Predicated region
    $region6: #{tpu_custom_call.1} parent=1 // pred_check
      _
    $region7: #{tpu_custom_call.1} parent=1 // pred_check_branch
      %14 = sbr.rel (0) target = $region9
    $region8: #{tpu_custom_call.1} parent=1 // pred_region
      _
    $region9: #{tpu_custom_call.1} parent=1 // pred_fallthru
      _
    // Predicated region
    $region10: #{tpu_custom_call.1} parent=1 // pred_check
      _
    $region11: #{tpu_custom_call.1} parent=1 // pred_check_branch
      %16 = sbr.rel (0) target = $region13
    $region12: #{tpu_custom_call.1} parent=1 // pred_region
      _
    $region13: #{tpu_custom_call.1} parent=1 // pred_fallthru
      _
    // Predicated region
    $region14: #{tpu_custom_call.1} parent=1 // pred_check
      _
    $region15: #{tpu_custom_call.1} parent=1 // pred_check_branch
      %18 = sbr.rel (0) target = $region17
    $region16: #{tpu_custom_call.1} parent=1 // pred_region
      _
    $region17: #{tpu_custom_call.1} parent=1 // pred_fallthru
      _
    // Predicated region
    $region18: #{tpu_custom_call.1} parent=1 // pred_check
      _
    $region19: #{tpu_custom_call.1} parent=1 // pred_check_branch
      %20 = sbr.rel (0) target = $region21
    $region20: #{tpu_custom_call.1} parent=1 // pred_region
      _
    $region21: #{tpu_custom_call.1} parent=1 // pred_fallthru
      _
    %v22 = vld [vmem:[%s0] sm:$0xff]
    %v23 = vpack.c.bf16 %v22, %v22
    %v24 = vld [vmem:[%s1] sm:$0xf]
    %v25 = vld [vmem:[%s1 + $0x4] sm:$0xf]
    %v26 = vld [vmem:[%s2] sm:$0x1]
    %v28 = vperm.slane %v26, 0
    %v32 = vunpack.c.l.b16 %v24
    %v33 = vunpack.c.l.b16 %v25
    %v34 = vpack.c.b16 %v33, %v32
    %vm36 = vcmask 130048
    %v38 = vsel %vm36, %v23, 0
    %40 = vmatpush.bf16.msra.mxu0 0
    %41 = vmatpush.bf16.msra.mxu0 0
    %42 = vmatpush.bf16.msra.mxu0 0
    %43 = vmatpush.bf16.msra.mxu0 0
    %44 = vmatpush.bf16.msra.mxu0 0
    %45 = vmatpush.bf16.msra.mxu0 0
    %46 = vmatpush.bf16.msra.mxu0 0
    %47 = vmatpush.bf16.msra.mxu0 %v34
    %48 = vmatmul.bf16.gmra.mxu0 %v38
    %v49 = vpop.f32.mrf.mxu0
    %v50 = vadd.f32 %v28, %v49
    %v51 = vpop.f32.mrf.mxu0
    %52 = vdwg.mxu0
    %v53 = vmax.f32 %v50, 0.0
    %v54 = vpack.c.bf16 %v53, %v53
    %v55 = vld [vmem:[%s3] sm:$0xf]
    %v56 = vld [vmem:[%s3 + $0x4] sm:$0xf]
    %v57 = vld [vmem:[%s3 + $0x8] sm:$0xf]
    %v58 = vld [vmem:[%s3 + $0xc] sm:$0xf]
    %v59 = vld [vmem:[%s4] sm:$0x1]
    %v61 = vperm.slane %v59, 0
    %v67 = vunpack.c.l.b16 %v55
    %v68 = vunpack.c.l.b16 %v56
    %v69 = vunpack.c.l.b16 %v57
    %v70 = vunpack.c.l.b16 %v58
    %v71 = vpack.c.b16 %v68, %v67
    %v72 = vpack.c.b16 %v70, %v69
    %vm75 = vcmask 261120
    %v77 = vsel %vm75, %v54, 0
    %79 = vmatpush.bf16.msra.mxu0 0
    %80 = vmatpush.bf16.msra.mxu0 0
    %81 = vmatpush.bf16.msra.mxu0 0
    %82 = vmatpush.bf16.msra.mxu0 0
    %83 = vmatpush.bf16.msra.mxu0 0
    %84 = vmatpush.bf16.msra.mxu0 0
    %85 = vmatpush.bf16.msra.mxu0 %v72
    %86 = vmatpush.bf16.msra.mxu0 %v71
    %87 = vmatmul.bf16.gmra.mxu0 %v77
    %v88 = vpop.f32.mrf.mxu0
    %v89 = vadd.f32 %v61, %v88
    %v90 = vpop.f32.mrf.mxu0
    %91 = vdwg.mxu0
    %vm92 = vcmask 64512
    %93 = vst.msk [vmem:[#allocation2] sm:$0xff] %vm92, %v89
    // Predicated region
    $region22: #{tpu_custom_call.1} parent=1 // pred_check
      _
    $region23: #{tpu_custom_call.1} parent=1 // pred_check_branch
      %95 = sbr.rel (0) target = $region25
    $region24: #{tpu_custom_call.1} parent=1 // pred_region
      %97 = vsyncadd [#allocation3], 0
      %s99 = sshll.u32 [#allocation2], 4
      %s100 = int_to_ptr.vmem [resolvable:$true] %s99
      %s101 = sshll.u32 %s5, 4
      %s102 = int_to_ptr.hbm [resolvable:$true] %s101
      %104 = dma.vmem_to_hbm [thread:$0]  %s100, 128, %s102, [#allocation3]
    $region25: #{tpu_custom_call.1} parent=1 // pred_fallthru
      _
    // Predicated region
    $region26: #{tpu_custom_call.1} parent=1 // pred_check
      _
    $region27: #{tpu_custom_call.1} parent=1 // pred_check_branch
      %106 = sbr.rel (0) target = $region29
    $region28: #{tpu_custom_call.1} parent=1 // pred_region
      %108 = dma.done [#allocation3], 128
    $region29: #{tpu_custom_call.1} parent=1 // pred_fallthru
      _
    %109 = vsyncpa [#allocation3], 1

</llo_original>
